<compile_context>
chip_gen: v7x
topology: tpu7x:2x2x1
jax: 0.10.0
libtpu: 0.0.40
codegen_flags: <defaults>
</compile_context>

<pallas_src>
import jax
import jax.numpy as jnp
from jax.experimental import pallas as pl
from jax.experimental.pallas import tpu as pltpu

LANES = 128
SUBLANES = 8
CHUNK_ROWS = 64             # inner-loop chunk: 8 vregs per operand per step
DEFAULT_TILE_ROWS = 8192    # 4 MiB per input block (fits v7x's 64 MiB VMEM)
BIG_VMEM_TILE_ROWS = 16384  # 8 MiB per input block (128 MiB VMEM parts)


def _cdiv(a, b):
    return -(-a // b)


def _round_up(a, b):
    return _cdiv(a, b) * b


def _hw_config():
    """(tile_rows_cap, vmem_limit_bytes) — generation aware, safe fallback."""
    tile_cap = DEFAULT_TILE_ROWS
    vmem_limit = 32 * 1024 * 1024
    try:
        info = pltpu.get_tpu_info()
        cap = getattr(info, "vmem_capacity_bytes", 0) or 0
        if cap >= 96 * 1024 * 1024:        # 128 MiB-VMEM parts (v5e/v6e/...)
            tile_cap = BIG_VMEM_TILE_ROWS
            vmem_limit = 48 * 1024 * 1024
    except Exception:
        pass
    return tile_cap, vmem_limit


def _num_partitions():
    """Leading 'parallel' partitions: 2 on multi-TensorCore/megacore parts."""
    try:
        info = pltpu.get_tpu_info()
        for name in ("num_tensorcores", "tensorcores_per_chip",
                     "num_cores", "num_cores_per_chip", "core_count"):
            val = getattr(info, name, None)
            if isinstance(val, int) and val > 1:
                return 2
    except Exception:
        pass
    try:
        kind = jax.devices()[0].device_kind.lower()
        # Megacore (v4/v5p) and dual-TensorCore (v7x) chips benefit from a
        # leading "parallel" partition axis; single-TC v5e/v6e do not.
        if ("v4" in kind) or ("v5p" in kind) or ("7" in kind):
            return 2
    except Exception:
        pass
    return 1


def regularization_loss(prediction, gt, loss_weight=0.1, eps=1e-6):
    """Pallas implementation of RegularizationLoss.forward."""
    assert prediction.shape == gt.shape
    n = int(prediction.size)
    assert n > 0

    pred_flat = prediction.reshape(-1)
    gt_flat = gt.reshape(-1)

    tile_cap, vmem_limit = _hw_config()
    partitions = _num_partitions()

    rem = n % LANES
    if rem:
        # Lane remainder (< 128 elements).  gt is padded with 1.0 (> 0.001) so
        # padded elements never enter the masked sum/count.
        # TODO(synk): for large non-128-multiple inputs this jnp.pad is a full
        # extra HBM pass; replace with flat 1-D blocks + in-kernel element
        # masking once 1-D block layouts are validated on hardware.
        pad = LANES - rem
        pred_flat = jnp.pad(pred_flat, (0, pad))
        gt_flat = jnp.pad(gt_flat, (0, pad), constant_values=1.0)

    rows = _cdiv(n, LANES)
    pred2d = pred_flat.reshape(rows, LANES)   # free bitcast, no copy
    gt2d = gt_flat.reshape(rows, LANES)

    if rows <= tile_cap:
        tile_rows = _round_up(rows, CHUNK_ROWS)   # single (possibly ragged) block
    else:
        tile_rows = tile_cap                      # multiple of CHUNK_ROWS
    num_blocks = _cdiv(rows, tile_rows)

    P = partitions if num_blocks >= partitions else 1
    nblk = _cdiv(num_blocks, P)
    n_chunks = tile_rows // CHUNK_ROWS
    needs_mask = (rows % tile_rows) != 0          # last block reads past `rows`

    def accumulate(pred_ref, gt_ref, sum_ref, cnt_ref, row_limit):
        """Fold this (tile_rows, 128) block into the resident accumulators."""
        if row_limit is not None:
            row_ids = jax.lax.broadcasted_iota(jnp.int32, (CHUNK_ROWS, LANES), 0)

        def body(j, carry):
            s, c = carry
            off = pl.multiple_of(j * CHUNK_ROWS, CHUNK_ROWS)
            p = pred_ref[pl.ds(off, CHUNK_ROWS), :].astype(jnp.float32)
            g = gt_ref[pl.ds(off, CHUNK_ROWS), :].astype(jnp.float32)
            keep = jnp.logical_not(g > jnp.float32(0.001))
            if row_limit is not None:
                keep = jnp.logical_and(keep, (row_ids + off) < row_limit)
            s = s + jnp.where(keep, p, jnp.float32(0.0))
            c = c + keep.astype(jnp.float32)
            return s, c

        zero = jnp.zeros((CHUNK_ROWS, LANES), jnp.float32)
        s, c = jax.lax.fori_loop(0, n_chunks, body, (zero, zero))
        # (64, 128) -> (8, 128): vreg-aligned fold, 7 adds per accumulator.
        sum_ref[...] += s.reshape(CHUNK_ROWS // SUBLANES, SUBLANES, LANES).sum(axis=0)
        cnt_ref[...] += c.reshape(CHUNK_ROWS // SUBLANES, SUBLANES, LANES).sum(axis=0)

    def kernel(pred_ref, gt_ref, sum_ref, cnt_ref):
        i = pl.program_id(1)

        @pl.when(i == 0)
        def _():
            sum_ref[...] = jnp.zeros_like(sum_ref)
            cnt_ref[...] = jnp.zeros_like(cnt_ref)

        blk = (pl.program_id(0) * nblk + i) if P > 1 else i

        def do_block():
            if not needs_mask:
                accumulate(pred_ref, gt_ref, sum_ref, cnt_ref, None)
            else:
                is_last = blk == num_blocks - 1

                @pl.when(jnp.logical_not(is_last))
                def _():
                    accumulate(pred_ref, gt_ref, sum_ref, cnt_ref, None)

                @pl.when(is_last)
                def _():
                    accumulate(pred_ref, gt_ref, sum_ref, cnt_ref,
                               rows - blk * tile_rows)

        if P > 1:
            # Skip the (clamped) out-of-range blocks of an uneven partition split.
            pl.when(blk < num_blocks)(do_block)
        else:
            do_block()

    if P > 1:
        def in_map(p, i):
            # Clamp so a skipped out-of-range block never issues an OOB DMA.
            return (jnp.minimum(p * nblk + i, num_blocks - 1), 0)
    else:
        def in_map(p, i):
            return (i, 0)

    def out_map(p, i):
        return (p, 0, 0)

    sums, cnts = pl.pallas_call(
        kernel,
        out_shape=(
            jax.ShapeDtypeStruct((P, SUBLANES, LANES), jnp.float32),
            jax.ShapeDtypeStruct((P, SUBLANES, LANES), jnp.float32),
        ),
        grid_spec=pltpu.PrefetchScalarGridSpec(
            num_scalar_prefetch=0,
            grid=(P, nblk),
            in_specs=[
                pl.BlockSpec((tile_rows, LANES), in_map),
                pl.BlockSpec((tile_rows, LANES), in_map),
            ],
            out_specs=[
                pl.BlockSpec((None, SUBLANES, LANES), out_map),
                pl.BlockSpec((None, SUBLANES, LANES), out_map),
            ],
        ),
        compiler_params=pltpu.CompilerParams(
            dimension_semantics=("parallel", "arbitrary"),
            vmem_limit_bytes=vmem_limit,
        ),
    )(pred2d, gt2d)

    total = jnp.sum(sums)
    count = jnp.sum(cnts)
    # loss = 1 / (sum / (numel + eps)) * w  ==  (numel + eps) / sum * w
    loss = (count + jnp.float32(eps)) / total
    return loss * jnp.float32(loss_weight)


def _reference(prediction, gt, loss_weight=0.1, eps=1e-6):
    keep = jnp.logical_not(gt > 0.001)
    s = jnp.sum(jnp.where(keep, prediction, 0.0))
    c = jnp.sum(keep.astype(jnp.float32))
    return (1.0 / (s / (c + eps))) * loss_weight


if __name__ == "__main__":
    key = jax.random.PRNGKey(0)
    k1, k2 = jax.random.split(key)

    # Small NCHW shapes like the PyTorch module would see (128-aligned numel).
    shape = (2, 4, 16, 16)
    prediction = jax.random.uniform(k1, shape, dtype=jnp.float32)
    gt_raw = jax.random.uniform(k2, shape, dtype=jnp.float32)
    gt = jnp.where(gt_raw > 0.5, gt_raw, 0.0)

    loss = jax.block_until_ready(regularization_loss(prediction, gt))
    ref = _reference(prediction, gt)
    assert jnp.allclose(loss, ref, rtol=1e-5, atol=1e-6), (loss, ref)

    # Ragged shape: exercises the lane-remainder pad + masked ragged block.
    shape2 = (1, 3, 11, 13)
    k3, k4 = jax.random.split(k2)
    p2 = jax.random.uniform(k3, shape2, dtype=jnp.float32)
    g2_raw = jax.random.uniform(k4, shape2, dtype=jnp.float32)
    g2 = jnp.where(g2_raw > 0.5, g2_raw, 0.0)

    loss2 = jax.block_until_ready(regularization_loss(p2, g2))
    ref2 = _reference(p2, g2)
    assert jnp.allclose(loss2, ref2, rtol=1e-5, atol=1e-6), (loss2, ref2)

    # Moderate 128-aligned shape: exercises the multi-block grid accumulation
    # and the unmasked fast path for full tiles (no wrapper-side copy).
    shape3 = (2, 16, 300, 256)
    k5, k6 = jax.random.split(k4)
    p3 = jax.random.uniform(k5, shape3, dtype=jnp.float32)
    g3_raw = jax.random.uniform(k6, shape3, dtype=jnp.float32)
    g3 = jnp.where(g3_raw > 0.5, g3_raw, 0.0)

    loss3 = jax.block_until_ready(regularization_loss(p3, g3))
    ref3 = _reference(p3, g3)
    assert jnp.allclose(loss3, ref3, rtol=1e-5, atol=1e-6), (loss3, ref3)

    print("KERNEL_OK")
</pallas_src>

<mosaic_0001>
module attributes {stable_mosaic.version = 11 : i64} {
  func.func @kernel(%arg0: i32, %arg1: i32, %arg2: memref<64x128xf32, #tpu.memory_space<vmem>>, %arg3: memref<64x128xf32, #tpu.memory_space<vmem>>, %arg4: memref<1x8x128xf32, #tpu.memory_space<vmem>>, %arg5: memref<1x8x128xf32, #tpu.memory_space<vmem>>) attributes {dimension_semantics = [#tpu.dimension_semantics<parallel>, #tpu.dimension_semantics<arbitrary>], iteration_bounds = array<i64: 1, 1>, scalar_prefetch = 0 : i64, scratch_operands = 0 : i64, tpu.core_type = #tpu.core_type<tc>, window_params = [{transform_indices = @transform_0, window_bounds = array<i64: 64, 128>}, {transform_indices = @transform_1, window_bounds = array<i64: 64, 128>}, {transform_indices = @transform_2, window_bounds = array<i64: 1, 8, 128>}, {transform_indices = @transform_3, window_bounds = array<i64: 1, 8, 128>}]} {
    %c0_i32 = arith.constant 0 : i32
    %0 = arith.cmpi eq, %arg1, %c0_i32 : i32
    %1 = arith.extui %0 : i1 to i32
    %c0_i32_0 = arith.constant 0 : i32
    %2 = arith.cmpi ne, %1, %c0_i32_0 : i32
    scf.if %2 {
      %cst = arith.constant 0.000000e+00 : f32
      %9 = vector.broadcast %cst : f32 to vector<8x128xf32>
      %c0 = arith.constant 0 : index
      %c0_4 = arith.constant 0 : index
      %c0_5 = arith.constant 0 : index
      %10 = vector.load %arg4[%c0, %c0_4, %c0_5] : memref<1x8x128xf32, #tpu.memory_space<vmem>>, vector<1x8x128xf32>
      %11 = vector.shape_cast %10 : vector<1x8x128xf32> to vector<8x128xf32>
      %12 = vector.shape_cast %9 : vector<8x128xf32> to vector<1x8x128xf32>
      tpu.vector_store %arg4[%c0, %c0_4, %c0_5], %12 {strides = array<i32>} : memref<1x8x128xf32, #tpu.memory_space<vmem>>, vector<1x8x128xf32>,
      %cst_6 = arith.constant 0.000000e+00 : f32
      %13 = vector.broadcast %cst_6 : f32 to vector<8x128xf32>
      %c0_7 = arith.constant 0 : index
      %c0_8 = arith.constant 0 : index
      %c0_9 = arith.constant 0 : index
      %14 = vector.load %arg5[%c0_7, %c0_8, %c0_9] : memref<1x8x128xf32, #tpu.memory_space<vmem>>, vector<1x8x128xf32>
      %15 = vector.shape_cast %14 : vector<1x8x128xf32> to vector<8x128xf32>
      %16 = vector.shape_cast %13 : vector<8x128xf32> to vector<1x8x128xf32>
      tpu.vector_store %arg5[%c0_7, %c0_8, %c0_9], %16 {strides = array<i32>} : memref<1x8x128xf32, #tpu.memory_space<vmem>>, vector<1x8x128xf32>,
    } else {
    }
    %c0_i32_1 = arith.constant 0 : i32
    %3 = arith.cmpi eq, %arg1, %c0_i32_1 : i32
    %true = arith.constant true
    %4 = arith.xori %3, %true : i1
    %5 = arith.extui %4 : i1 to i32
    %c0_i32_2 = arith.constant 0 : i32
    %6 = arith.cmpi ne, %5, %c0_i32_2 : i32
    scf.if %6 {
      %cst = arith.constant 0.000000e+00 : f32
      %9 = vector.broadcast %cst : f32 to vector<64x128xf32>
      %c0_i32_4 = arith.constant 0 : i32
      %c64_i32 = arith.constant 64 : i32
      %10 = arith.muli %c0_i32_4, %c64_i32 : i32
      %11 = tpu.assume_multiple %10, 64 : i32
      %12 = arith.index_cast %11 : i32 to index
      %c0 = arith.constant 0 : index
      %13 = vector.load %arg2[%12, %c0] : memref<64x128xf32, #tpu.memory_space<vmem>>, vector<64x128xf32>
      %14 = arith.index_cast %11 : i32 to index
      %c0_5 = arith.constant 0 : index
      %15 = vector.load %arg3[%14, %c0_5] : memref<64x128xf32, #tpu.memory_space<vmem>>, vector<64x128xf32>
      %cst_6 = arith.constant 1.000000e-03 : f32
      %16 = vector.broadcast %cst_6 : f32 to vector<64x128xf32>
      %17 = arith.cmpf ogt, %15, %16 : vector<64x128xf32>
      %cst_7 = arith.constant dense<true> : vector<64x128xi1>
      %18 = arith.xori %17, %cst_7 : vector<64x128xi1>
      %cst_8 = arith.constant 0.000000e+00 : f32
      %19 = vector.broadcast %cst_8 : f32 to vector<64x128xf32>
      %20 = arith.select %18, %13, %19 : vector<64x128xi1>, vector<64x128xf32>
      %21 = arith.addf %9, %20 : vector<64x128xf32>
      %22 = arith.extui %18 : vector<64x128xi1> to vector<64x128xi32>
      %23 = arith.sitofp %22 : vector<64x128xi32> to vector<64x128xf32>
      %24 = arith.addf %9, %23 : vector<64x128xf32>
      %c1_i32 = arith.constant 1 : i32
      %c0_9 = arith.constant 0 : index
      %c0_10 = arith.constant 0 : index
      %c0_11 = arith.constant 0 : index
      %25 = vector.load %arg4[%c0_9, %c0_10, %c0_11] : memref<1x8x128xf32, #tpu.memory_space<vmem>>, vector<1x8x128xf32>
      %26 = vector.shape_cast %25 : vector<1x8x128xf32> to vector<8x128xf32>
      %27 = vector.shape_cast %21 : vector<64x128xf32> to vector<8x8x128xf32>
      %cst_12 = arith.constant dense<0.000000e+00> : vector<8x128xf32>
      %28 = vector.multi_reduction <add>, %27, %cst_12 [0] : vector<8x8x128xf32> to vector<8x128xf32>
      %29 = arith.addf %26, %28 : vector<8x128xf32>
      %c0_13 = arith.constant 0 : index
      %c0_14 = arith.constant 0 : index
      %c0_15 = arith.constant 0 : index
      %30 = vector.load %arg4[%c0_13, %c0_14, %c0_15] : memref<1x8x128xf32, #tpu.memory_space<vmem>>, vector<1x8x128xf32>
      %31 = vector.shape_cast %30 : vector<1x8x128xf32> to vector<8x128xf32>
      %32 = vector.shape_cast %29 : vector<8x128xf32> to vector<1x8x128xf32>
      tpu.vector_store %arg4[%c0_13, %c0_14, %c0_15], %32 {strides = array<i32>} : memref<1x8x128xf32, #tpu.memory_space<vmem>>, vector<1x8x128xf32>,
      %c0_16 = arith.constant 0 : index
      %c0_17 = arith.constant 0 : index
      %c0_18 = arith.constant 0 : index
      %33 = vector.load %arg5[%c0_16, %c0_17, %c0_18] : memref<1x8x128xf32, #tpu.memory_space<vmem>>, vector<1x8x128xf32>
      %34 = vector.shape_cast %33 : vector<1x8x128xf32> to vector<8x128xf32>
      %35 = vector.shape_cast %24 : vector<64x128xf32> to vector<8x8x128xf32>
      %cst_19 = arith.constant dense<0.000000e+00> : vector<8x128xf32>
      %36 = vector.multi_reduction <add>, %35, %cst_19 [0] : vector<8x8x128xf32> to vector<8x128xf32>
      %37 = arith.addf %34, %36 : vector<8x128xf32>
      %c0_20 = arith.constant 0 : index
      %c0_21 = arith.constant 0 : index
      %c0_22 = arith.constant 0 : index
      %38 = vector.load %arg5[%c0_20, %c0_21, %c0_22] : memref<1x8x128xf32, #tpu.memory_space<vmem>>, vector<1x8x128xf32>
      %39 = vector.shape_cast %38 : vector<1x8x128xf32> to vector<8x128xf32>
      %40 = vector.shape_cast %37 : vector<8x128xf32> to vector<1x8x128xf32>
      tpu.vector_store %arg5[%c0_20, %c0_21, %c0_22], %40 {strides = array<i32>} : memref<1x8x128xf32, #tpu.memory_space<vmem>>, vector<1x8x128xf32>,
    } else {
    }
    %7 = arith.extui %3 : i1 to i32
    %c0_i32_3 = arith.constant 0 : i32
    %8 = arith.cmpi ne, %7, %c0_i32_3 : i32
    scf.if %8 {
      %c64_i32 = arith.constant 64 : i32
      %9 = arith.muli %arg1, %c64_i32 : i32
      %c16_i32 = arith.constant 16 : i32
      %10 = arith.subi %c16_i32, %9 : i32
      %11 = tpu.iota {dimensions = array<i32: 0>} : vector<64x128xi32>
      %cst = arith.constant 0.000000e+00 : f32
      %12 = vector.broadcast %cst : f32 to vector<64x128xf32>
      %c0_i32_4 = arith.constant 0 : i32
      %c64_i32_5 = arith.constant 64 : i32
      %13 = arith.muli %c0_i32_4, %c64_i32_5 : i32
      %14 = tpu.assume_multiple %13, 64 : i32
      %15 = arith.index_cast %14 : i32 to index
      %c0 = arith.constant 0 : index
      %16 = vector.load %arg2[%15, %c0] : memref<64x128xf32, #tpu.memory_space<vmem>>, vector<64x128xf32>
      %17 = arith.index_cast %14 : i32 to index
      %c0_6 = arith.constant 0 : index
      %18 = vector.load %arg3[%17, %c0_6] : memref<64x128xf32, #tpu.memory_space<vmem>>, vector<64x128xf32>
      %cst_7 = arith.constant 1.000000e-03 : f32
      %19 = vector.broadcast %cst_7 : f32 to vector<64x128xf32>
      %20 = arith.cmpf ogt, %18, %19 : vector<64x128xf32>
      %cst_8 = arith.constant dense<true> : vector<64x128xi1>
      %21 = arith.xori %20, %cst_8 : vector<64x128xi1>
      %22 = vector.broadcast %14 : i32 to vector<64x128xi32>
      %23 = arith.addi %11, %22 : vector<64x128xi32>
      %24 = vector.broadcast %10 : i32 to vector<64x128xi32>
      %25 = arith.cmpi slt, %23, %24 : vector<64x128xi32>
      %26 = arith.andi %21, %25 : vector<64x128xi1>
      %cst_9 = arith.constant 0.000000e+00 : f32
      %27 = vector.broadcast %cst_9 : f32 to vector<64x128xf32>
      %28 = arith.select %26, %16, %27 : vector<64x128xi1>, vector<64x128xf32>
      %29 = arith.addf %12, %28 : vector<64x128xf32>
      %30 = arith.extui %26 : vector<64x128xi1> to vector<64x128xi32>
      %31 = arith.sitofp %30 : vector<64x128xi32> to vector<64x128xf32>
      %32 = arith.addf %12, %31 : vector<64x128xf32>
      %c1_i32 = arith.constant 1 : i32
      %c0_10 = arith.constant 0 : index
      %c0_11 = arith.constant 0 : index
      %c0_12 = arith.constant 0 : index
      %33 = vector.load %arg4[%c0_10, %c0_11, %c0_12] : memref<1x8x128xf32, #tpu.memory_space<vmem>>, vector<1x8x128xf32>
      %34 = vector.shape_cast %33 : vector<1x8x128xf32> to vector<8x128xf32>
      %35 = vector.shape_cast %29 : vector<64x128xf32> to vector<8x8x128xf32>
      %cst_13 = arith.constant dense<0.000000e+00> : vector<8x128xf32>
      %36 = vector.multi_reduction <add>, %35, %cst_13 [0] : vector<8x8x128xf32> to vector<8x128xf32>
      %37 = arith.addf %34, %36 : vector<8x128xf32>
      %c0_14 = arith.constant 0 : index
      %c0_15 = arith.constant 0 : index
      %c0_16 = arith.constant 0 : index
      %38 = vector.load %arg4[%c0_14, %c0_15, %c0_16] : memref<1x8x128xf32, #tpu.memory_space<vmem>>, vector<1x8x128xf32>
      %39 = vector.shape_cast %38 : vector<1x8x128xf32> to vector<8x128xf32>
      %40 = vector.shape_cast %37 : vector<8x128xf32> to vector<1x8x128xf32>
      tpu.vector_store %arg4[%c0_14, %c0_15, %c0_16], %40 {strides = array<i32>} : memref<1x8x128xf32, #tpu.memory_space<vmem>>, vector<1x8x128xf32>,
      %c0_17 = arith.constant 0 : index
      %c0_18 = arith.constant 0 : index
      %c0_19 = arith.constant 0 : index
      %41 = vector.load %arg5[%c0_17, %c0_18, %c0_19] : memref<1x8x128xf32, #tpu.memory_space<vmem>>, vector<1x8x128xf32>
      %42 = vector.shape_cast %41 : vector<1x8x128xf32> to vector<8x128xf32>
      %43 = vector.shape_cast %32 : vector<64x128xf32> to vector<8x8x128xf32>
      %cst_20 = arith.constant dense<0.000000e+00> : vector<8x128xf32>
      %44 = vector.multi_reduction <add>, %43, %cst_20 [0] : vector<8x8x128xf32> to vector<8x128xf32>
      %45 = arith.addf %42, %44 : vector<8x128xf32>
      %c0_21 = arith.constant 0 : index
      %c0_22 = arith.constant 0 : index
      %c0_23 = arith.constant 0 : index
      %46 = vector.load %arg5[%c0_21, %c0_22, %c0_23] : memref<1x8x128xf32, #tpu.memory_space<vmem>>, vector<1x8x128xf32>
      %47 = vector.shape_cast %46 : vector<1x8x128xf32> to vector<8x128xf32>
      %48 = vector.shape_cast %45 : vector<8x128xf32> to vector<1x8x128xf32>
      tpu.vector_store %arg5[%c0_21, %c0_22, %c0_23], %48 {strides = array<i32>} : memref<1x8x128xf32, #tpu.memory_space<vmem>>, vector<1x8x128xf32>,
    } else {
    }
    return
  }
  func.func @transform_0(%arg0: i32, %arg1: i32) -> (i32, i32) {
    %c0_i32 = arith.constant 0 : i32
    %c0_i32_0 = arith.constant 0 : i32
    return %arg1, %c0_i32 : i32, i32
  }
  func.func @transform_1(%arg0: i32, %arg1: i32) -> (i32, i32) {
    %c0_i32 = arith.constant 0 : i32
    %c0_i32_0 = arith.constant 0 : i32
    return %arg1, %c0_i32 : i32, i32
  }
  func.func @transform_2(%arg0: i32, %arg1: i32) -> (i32, i32, i32) {
    %c0_i32 = arith.constant 0 : i32
    %c0_i32_0 = arith.constant 0 : i32
    %c0_i32_1 = arith.constant 0 : i32
    return %arg0, %c0_i32, %c0_i32_0 : i32, i32, i32
  }
  func.func @transform_3(%arg0: i32, %arg1: i32) -> (i32, i32, i32) {
    %c0_i32 = arith.constant 0 : i32
    %c0_i32_0 = arith.constant 0 : i32
    %c0_i32_1 = arith.constant 0 : i32
    return %arg0, %c0_i32, %c0_i32_0 : i32, i32, i32
  }
}

</mosaic_0001>

<llo_original>
// kernel: tpu_custom_call.1
$region0: #{tpu_custom_call.1}
  #allocation0 [shape = 'u32[]', space=smem, size = 0x4, offset = 0x4, fixed_abs, tag = 'smem constant byte address 0x4 - core index']
  #allocation1 [shape = 'u32[144,128]{1,0:T(1,128)}', space=vmem, size = 0x12000, scoped, tag = 'internal scratch']
  %s0 = inlined_call_operand.hbm [shape: f32[16,128], index: 0, kind: input, shape index: {}]
  %s1 = inlined_call_operand.hbm [shape: f32[16,128], index: 1, kind: input, shape index: {}]
  %s2 = inlined_call_operand.hbm [shape: f32[1,8,128], index: 2, kind: output, shape index: {0}]
  %s3 = inlined_call_operand.hbm [shape: f32[1,8,128], index: 3, kind: output, shape index: {1}]
  %4 = xla_tuple %s2, %s3
  %s5 = sld [smem:[#allocation0]]
  $region46: #{tpu_custom_call.1} parent=0
    _
  %s7 = ssub.s32 1, %s5
  %s8 = scalar_select 0, %s7, %s5
  $region1: #{tpu_custom_call.1} parent=0
    #allocation2 [shape = 'u8[32768]{0}', space=vmem, size = 0x8000, scoped, tag = 'input window, operand 0, single buffered']
    #allocation3 [shape = 's32[1]{0}', space=sflag, size = 0x4, scoped, tag = 'scoped memory for tpu_custom_call.1']
    #allocation4 [shape = 's32[1]{0}', space=sflag, size = 0x4, scoped, tag = 'scoped memory for tpu_custom_call.1']
    #allocation5 [shape = 'u8[32768]{0}', space=vmem, size = 0x8000, scoped, tag = 'input window, operand 1, single buffered']
    #allocation6 [shape = 's32[1]{0}', space=sflag, size = 0x4, scoped, tag = 'scoped memory for tpu_custom_call.1']
    #allocation7 [shape = 'u8[4096]{0}', space=vmem, size = 0x1000, scoped, tag = 'output window, operand 0, single buffered']
    #allocation8 [shape = 'u8[4096]{0}', space=vmem, size = 0x1000, scoped, tag = 'output window, operand 1, single buffered']
    #allocation9 [shape = 's32[1]{0}', space=sflag, size = 0x4, scoped, tag = 'scoped memory for tpu_custom_call.1']
    %9 = vsyncpa [#allocation3], 0
    %10 = vsyncpa [#allocation6], 0
    %11 = vsyncpa [#allocation4], 0
    %12 = vsyncpa [#allocation9], 0
    // Predicated region
    $region2: #{tpu_custom_call.1} parent=1 // pred_check
      _
    $region3: #{tpu_custom_call.1} parent=1 // pred_check_branch
      %14 = sbr.rel (0) target = $region5
    $region4: #{tpu_custom_call.1} parent=1 // pred_region
      %s16 = ssub.s32 1024, 256
      %17 = vsyncadd [#allocation3], %s16
      %s18 = sshll.u32 [#allocation2], 4
      %s19 = int_to_ptr.vmem [resolvable:$true] %s18
      %24 = dma.hbm_to_vmem [thread:$0]  %s0, 256, %s19, [#allocation3], 128, 128, 8
    $region5: #{tpu_custom_call.1} parent=1 // pred_fallthru
      _
    // Predicated region
    $region6: #{tpu_custom_call.1} parent=1 // pred_check
      _
    $region7: #{tpu_custom_call.1} parent=1 // pred_check_branch
      %26 = sbr.rel (0) target = $region9
    $region8: #{tpu_custom_call.1} parent=1 // pred_region
      %s28 = ssub.s32 1024, 256
      %29 = vsyncadd [#allocation6], %s28
      %s30 = sshll.u32 [#allocation5], 4
      %s31 = int_to_ptr.vmem [resolvable:$true] %s30
      %36 = dma.hbm_to_vmem [thread:$0]  %s1, 256, %s31, [#allocation6], 128, 128, 8
    $region9: #{tpu_custom_call.1} parent=1 // pred_fallthru
      _
    // Predicated region
    $region10: #{tpu_custom_call.1} parent=1 // pred_check
      _
    $region11: #{tpu_custom_call.1} parent=1 // pred_check_branch
      %38 = sbr.rel (0) target = $region13
    $region12: #{tpu_custom_call.1} parent=1 // pred_region
      %39 = dma.done [#allocation3], 1024
    $region13: #{tpu_custom_call.1} parent=1 // pred_fallthru
      _
    // Predicated region
    $region14: #{tpu_custom_call.1} parent=1 // pred_check
      _
    $region15: #{tpu_custom_call.1} parent=1 // pred_check_branch
      %41 = sbr.rel (0) target = $region17
    $region16: #{tpu_custom_call.1} parent=1 // pred_region
      %42 = dma.done [#allocation6], 1024
    $region17: #{tpu_custom_call.1} parent=1 // pred_fallthru
      _
    %p43 = scmp.eq.s32.totalorder 0, 0
    // Predicated region
    $region18: #{tpu_custom_call.1} parent=1 // pred_check
      %p44 = pneg %p43
    $region19: #{tpu_custom_call.1} parent=1 // pred_check_branch
      %46 = sbr.rel (%p44) target = $region21
    $region20: #{tpu_custom_call.1} parent=1 // pred_region
      %47 = vst [vmem:[#allocation7] sm:$0xff] 0.0
      %48 = vst [vmem:[#allocation8] sm:$0xff] 0.0
    $region21: #{tpu_custom_call.1} parent=1 // pred_fallthru
      _
    %p49 = scmp.ne.s32.totalorder 0, 0
    // Predicated region
    $region22: #{tpu_custom_call.1} parent=1 // pred_check
      %p50 = pneg %p49
    $region23: #{tpu_custom_call.1} parent=1 // pred_check_branch
      %52 = sbr.rel (%p50) target = $region25
    $region24: #{tpu_custom_call.1} parent=1 // pred_region
      %v53 = vld [vmem:[#allocation2] sm:$0xff]
      %v54 = vld [vmem:[#allocation2 + $0x8] sm:$0xff]
      %v55 = vld [vmem:[#allocation2 + $0x10] sm:$0xff]
      %v56 = vld [vmem:[#allocation2 + $0x18] sm:$0xff]
      %v57 = vld [vmem:[#allocation2 + $0x20] sm:$0xff]
      %v58 = vld [vmem:[#allocation2 + $0x28] sm:$0xff]
      %v59 = vld [vmem:[#allocation2 + $0x30] sm:$0xff]
      %v60 = vld [vmem:[#allocation2 + $0x38] sm:$0xff]
      %v61 = vld [vmem:[#allocation5] sm:$0xff]
      %v62 = vld [vmem:[#allocation5 + $0x8] sm:$0xff]
      %v63 = vld [vmem:[#allocation5 + $0x10] sm:$0xff]
      %v64 = vld [vmem:[#allocation5 + $0x18] sm:$0xff]
      %v65 = vld [vmem:[#allocation5 + $0x20] sm:$0xff]
      %v66 = vld [vmem:[#allocation5 + $0x28] sm:$0xff]
      %v67 = vld [vmem:[#allocation5 + $0x30] sm:$0xff]
      %v68 = vld [vmem:[#allocation5 + $0x38] sm:$0xff]
      %vm69 = vcmp.gt.f32.partialorder %v61, 0.001
      %vm70 = vcmp.gt.f32.partialorder %v62, 0.001
      %vm71 = vcmp.gt.f32.partialorder %v63, 0.001
      %vm72 = vcmp.gt.f32.partialorder %v64, 0.001
      %vm73 = vcmp.gt.f32.partialorder %v65, 0.001
      %vm74 = vcmp.gt.f32.partialorder %v66, 0.001
      %vm75 = vcmp.gt.f32.partialorder %v67, 0.001
      %vm76 = vcmp.gt.f32.partialorder %v68, 0.001
      %vm77 = vmxor %vm69, 1
      %vm78 = vmxor %vm70, 1
      %vm79 = vmxor %vm71, 1
      %vm80 = vmxor %vm72, 1
      %vm81 = vmxor %vm73, 1
      %vm82 = vmxor %vm74, 1
      %vm83 = vmxor %vm75, 1
      %vm84 = vmxor %vm76, 1
      %v85 = vsel %vm77, %v53, 0.0
      %v86 = vsel %vm78, %v54, 0.0
      %v87 = vsel %vm79, %v55, 0.0
      %v88 = vsel %vm80, %v56, 0.0
      %v89 = vsel %vm81, %v57, 0.0
      %v90 = vsel %vm82, %v58, 0.0
      %v91 = vsel %vm83, %v59, 0.0
      %v92 = vsel %vm84, %v60, 0.0
      %v93 = vadd.f32 %v85, 0.0
      %v94 = vadd.f32 %v86, 0.0
      %v95 = vadd.f32 %v87, 0.0
      %v96 = vadd.f32 %v88, 0.0
      %v97 = vadd.f32 %v89, 0.0
      %v98 = vadd.f32 %v90, 0.0
      %v99 = vadd.f32 %v91, 0.0
      %v100 = vadd.f32 %v92, 0.0
      %v101 = vsel %vm77, 1, 0
      %v102 = vsel %vm78, 1, 0
      %v103 = vsel %vm79, 1, 0
      %v104 = vsel %vm80, 1, 0
      %v105 = vsel %vm81, 1, 0
      %v106 = vsel %vm82, 1, 0
      %v107 = vsel %vm83, 1, 0
      %v108 = vsel %vm84, 1, 0
      %v109 = vcvt.s32.f32 %v101
      %v110 = vcvt.s32.f32 %v102
      %v111 = vcvt.s32.f32 %v103
      %v112 = vcvt.s32.f32 %v104
      %v113 = vcvt.s32.f32 %v105
      %v114 = vcvt.s32.f32 %v106
      %v115 = vcvt.s32.f32 %v107
      %v116 = vcvt.s32.f32 %v108
      %v117 = vadd.f32 %v109, 0.0
      %v118 = vadd.f32 %v110, 0.0
      %v119 = vadd.f32 %v111, 0.0
      %v120 = vadd.f32 %v112, 0.0
      %v121 = vadd.f32 %v113, 0.0
      %v122 = vadd.f32 %v114, 0.0
      %v123 = vadd.f32 %v115, 0.0
      %v124 = vadd.f32 %v116, 0.0
      %v125 = vld [vmem:[#allocation7] sm:$0xff]
      %v126 = vadd.f32 %v93, %v94
      %v127 = vadd.f32 %v126, %v95
      %v128 = vadd.f32 %v127, %v96
      %v129 = vadd.f32 %v128, %v97
      %v130 = vadd.f32 %v129, %v98
      %v131 = vadd.f32 %v130, %v99
      %v132 = vadd.f32 %v131, %v100
      %v133 = vadd.f32 %v125, %v132
      %134 = vst [vmem:[#allocation7] sm:$0xff] %v133
      %v135 = vld [vmem:[#allocation8] sm:$0xff]
      %v136 = vadd.f32 %v117, %v118
      %v137 = vadd.f32 %v136, %v119
      %v138 = vadd.f32 %v137, %v120
      %v139 = vadd.f32 %v138, %v121
      %v140 = vadd.f32 %v139, %v122
      %v141 = vadd.f32 %v140, %v123
      %v142 = vadd.f32 %v141, %v124
      %v143 = vadd.f32 %v135, %v142
      %144 = vst [vmem:[#allocation8] sm:$0xff] %v143
    $region25: #{tpu_custom_call.1} parent=1 // pred_fallthru
      _
    // Predicated region
    $region26: #{tpu_custom_call.1} parent=1 // pred_check
      %p145 = pneg %p43
    $region27: #{tpu_custom_call.1} parent=1 // pred_check_branch
      %147 = sbr.rel (%p145) target = $region29
    $region28: #{tpu_custom_call.1} parent=1 // pred_region
      %s148 = smul.u32 0, 64
      %s149 = ssub.s32 16, %s148
      %v150 = vlaneseq
      %v151 = vshrl.u32 %v150, 7
      %v152 = vadd.s32 %v151, 8
      %v153 = vadd.s32 %v151, 16
      %v154 = vadd.s32 %v151, 24
      %v155 = vadd.s32 %v151, 32
      %v156 = vadd.s32 %v151, 40
      %v157 = vadd.s32 %v151, 48
      %v158 = vadd.s32 %v151, 56
      %v159 = vld [vmem:[#allocation2] sm:$0xff]
      %v160 = vld [vmem:[#allocation2 + $0x8] sm:$0xff]
      %v161 = vld [vmem:[#allocation2 + $0x10] sm:$0xff]
      %v162 = vld [vmem:[#allocation2 + $0x18] sm:$0xff]
      %v163 = vld [vmem:[#allocation2 + $0x20] sm:$0xff]
      %v164 = vld [vmem:[#allocation2 + $0x28] sm:$0xff]
      %v165 = vld [vmem:[#allocation2 + $0x30] sm:$0xff]
      %v166 = vld [vmem:[#allocation2 + $0x38] sm:$0xff]
      %v167 = vld [vmem:[#allocation5] sm:$0xff]
      %v168 = vld [vmem:[#allocation5 + $0x8] sm:$0xff]
      %v169 = vld [vmem:[#allocation5 + $0x10] sm:$0xff]
      %v170 = vld [vmem:[#allocation5 + $0x18] sm:$0xff]
      %v171 = vld [vmem:[#allocation5 + $0x20] sm:$0xff]
      %v172 = vld [vmem:[#allocation5 + $0x28] sm:$0xff]
      %v173 = vld [vmem:[#allocation5 + $0x30] sm:$0xff]
      %v174 = vld [vmem:[#allocation5 + $0x38] sm:$0xff]
      %vm175 = vcmp.gt.f32.partialorder %v167, 0.001
      %vm176 = vcmp.gt.f32.partialorder %v168, 0.001
      %vm177 = vcmp.gt.f32.partialorder %v169, 0.001
      %vm178 = vcmp.gt.f32.partialorder %v170, 0.001
      %vm179 = vcmp.gt.f32.partialorder %v171, 0.001
      %vm180 = vcmp.gt.f32.partialorder %v172, 0.001
      %vm181 = vcmp.gt.f32.partialorder %v173, 0.001
      %vm182 = vcmp.gt.f32.partialorder %v174, 0.001
      %vm183 = vmxor %vm175, 1
      %vm184 = vmxor %vm176, 1
      %vm185 = vmxor %vm177, 1
      %vm186 = vmxor %vm178, 1
      %vm187 = vmxor %vm179, 1
      %vm188 = vmxor %vm180, 1
      %vm189 = vmxor %vm181, 1
      %vm190 = vmxor %vm182, 1
      %v191 = vstv 0
      %v192 = vadd.s32 %v151, %v191
      %v193 = vadd.s32 %v152, %v191
      %v194 = vadd.s32 %v153, %v191
      %v195 = vadd.s32 %v154, %v191
      %v196 = vadd.s32 %v155, %v191
      %v197 = vadd.s32 %v156, %v191
      %v198 = vadd.s32 %v157, %v191
      %v199 = vadd.s32 %v158, %v191
      %v200 = vstv %s149
      %vm201 = vcmp.lt.s32.totalorder %v192, %v200
      %vm202 = vcmp.lt.s32.totalorder %v193, %v200
      %vm203 = vcmp.lt.s32.totalorder %v194, %v200
      %vm204 = vcmp.lt.s32.totalorder %v195, %v200
      %vm205 = vcmp.lt.s32.totalorder %v196, %v200
      %vm206 = vcmp.lt.s32.totalorder %v197, %v200
      %vm207 = vcmp.lt.s32.totalorder %v198, %v200
      %vm208 = vcmp.lt.s32.totalorder %v199, %v200
      %vm209 = vmand %vm183, %vm201
      %vm210 = vmand %vm184, %vm202
      %vm211 = vmand %vm185, %vm203
      %vm212 = vmand %vm186, %vm204
      %vm213 = vmand %vm187, %vm205
      %vm214 = vmand %vm188, %vm206
      %vm215 = vmand %vm189, %vm207
      %vm216 = vmand %vm190, %vm208
      %v217 = vsel %vm209, %v159, 0.0
      %v218 = vsel %vm210, %v160, 0.0
      %v219 = vsel %vm211, %v161, 0.0
      %v220 = vsel %vm212, %v162, 0.0
      %v221 = vsel %vm213, %v163, 0.0
      %v222 = vsel %vm214, %v164, 0.0
      %v223 = vsel %vm215, %v165, 0.0
      %v224 = vsel %vm216, %v166, 0.0
      %v225 = vadd.f32 %v217, 0.0
      %v226 = vadd.f32 %v218, 0.0
      %v227 = vadd.f32 %v219, 0.0
      %v228 = vadd.f32 %v220, 0.0
      %v229 = vadd.f32 %v221, 0.0
      %v230 = vadd.f32 %v222, 0.0
      %v231 = vadd.f32 %v223, 0.0
      %v232 = vadd.f32 %v224, 0.0
      %v233 = vsel %vm209, 1, 0
      %v234 = vsel %vm210, 1, 0
      %v235 = vsel %vm211, 1, 0
      %v236 = vsel %vm212, 1, 0
      %v237 = vsel %vm213, 1, 0
      %v238 = vsel %vm214, 1, 0
      %v239 = vsel %vm215, 1, 0
      %v240 = vsel %vm216, 1, 0
      %v241 = vcvt.s32.f32 %v233
      %v242 = vcvt.s32.f32 %v234
      %v243 = vcvt.s32.f32 %v235
      %v244 = vcvt.s32.f32 %v236
      %v245 = vcvt.s32.f32 %v237
      %v246 = vcvt.s32.f32 %v238
      %v247 = vcvt.s32.f32 %v239
      %v248 = vcvt.s32.f32 %v240
      %v249 = vadd.f32 %v241, 0.0
      %v250 = vadd.f32 %v242, 0.0
      %v251 = vadd.f32 %v243, 0.0
      %v252 = vadd.f32 %v244, 0.0
      %v253 = vadd.f32 %v245, 0.0
      %v254 = vadd.f32 %v246, 0.0
      %v255 = vadd.f32 %v247, 0.0
      %v256 = vadd.f32 %v248, 0.0
      %v257 = vld [vmem:[#allocation7] sm:$0xff]
      %v258 = vadd.f32 %v225, %v226
      %v259 = vadd.f32 %v258, %v227
      %v260 = vadd.f32 %v259, %v228
      %v261 = vadd.f32 %v260, %v229
      %v262 = vadd.f32 %v261, %v230
      %v263 = vadd.f32 %v262, %v231
      %v264 = vadd.f32 %v263, %v232
      %v265 = vadd.f32 %v257, %v264
      %266 = vst [vmem:[#allocation7] sm:$0xff] %v265
      %v267 = vld [vmem:[#allocation8] sm:$0xff]
      %v268 = vadd.f32 %v249, %v250
      %v269 = vadd.f32 %v268, %v251
      %v270 = vadd.f32 %v269, %v252
      %v271 = vadd.f32 %v270, %v253
      %v272 = vadd.f32 %v271, %v254
      %v273 = vadd.f32 %v272, %v255
      %v274 = vadd.f32 %v273, %v256
      %v275 = vadd.f32 %v267, %v274
      %276 = vst [vmem:[#allocation8] sm:$0xff] %v275
    $region29: #{tpu_custom_call.1} parent=1 // pred_fallthru
      _
    // Predicated region
    $region30: #{tpu_custom_call.1} parent=1 // pred_check
      _
    $region31: #{tpu_custom_call.1} parent=1 // pred_check_branch
      %278 = sbr.rel (0) target = $region33
    $region32: #{tpu_custom_call.1} parent=1 // pred_region
      %s280 = ssub.s32 128, 128
      %281 = vsyncadd [#allocation4], %s280
      %s283 = sshll.u32 [#allocation7], 4
      %s284 = int_to_ptr.vmem [resolvable:$true] %s283
      %286 = dma.vmem_to_hbm [thread:$0]  %s284, 128, %s2, [#allocation4]
    $region33: #{tpu_custom_call.1} parent=1 // pred_fallthru
      _
    // Predicated region
    $region34: #{tpu_custom_call.1} parent=1 // pred_check
      _
    $region35: #{tpu_custom_call.1} parent=1 // pred_check_branch
      %288 = sbr.rel (0) target = $region37
    $region36: #{tpu_custom_call.1} parent=1 // pred_region
      %s290 = ssub.s32 128, 128
      %291 = vsyncadd [#allocation9], %s290
      %s293 = sshll.u32 [#allocation8], 4
      %s294 = int_to_ptr.vmem [resolvable:$true] %s293
      %296 = dma.vmem_to_hbm [thread:$0]  %s294, 128, %s3, [#allocation9]
    $region37: #{tpu_custom_call.1} parent=1 // pred_fallthru
      _
    // Predicated region
    $region38: #{tpu_custom_call.1} parent=1 // pred_check
      _
    $region39: #{tpu_custom_call.1} parent=1 // pred_check_branch
      %298 = sbr.rel (0) target = $region41
    $region40: #{tpu_custom_call.1} parent=1 // pred_region
      %299 = dma.done [#allocation4], 128
    $region41: #{tpu_custom_call.1} parent=1 // pred_fallthru
      _
    // Predicated region
    $region42: #{tpu_custom_call.1} parent=1 // pred_check
      _
    $region43: #{tpu_custom_call.1} parent=1 // pred_check_branch
      %301 = sbr.rel (0) target = $region45
    $region44: #{tpu_custom_call.1} parent=1 // pred_region
      %302 = dma.done [#allocation9], 128
    $region45: #{tpu_custom_call.1} parent=1 // pred_fallthru
      _
    %303 = vsyncpa [#allocation3], 1
    %304 = vsyncpa [#allocation6], 1
    %305 = vsyncpa [#allocation4], 1
    %306 = vsyncpa [#allocation9], 1

</llo_original>
